<compile_context>
chip_gen: v6e
topology: v6e:2x2x1
jax: 0.10.0
libtpu: 0.0.40
codegen_flags: <defaults>
</compile_context>

<pallas_src>
import math

import jax
import jax.numpy as jnp
from jax.experimental import pallas as pl
from jax.experimental.pallas import tpu as pltpu


# ---------------------------------------------------------------------------
# Kernels
# ---------------------------------------------------------------------------
def _actor_step_kernel(x_ref, hx_ref, cx_ref,
                       w_xh_ref, b_gates_ref, w_heads_ref, b_heads_ref,
                       heads_ref, hx_out_ref, cx_out_ref):
    """Single LSTMCell step + fused (mean|logstd) heads.  No wrapper concat:
    the gate matmul is split over the x-rows and h-rows of the fused weight."""
    S = x_ref.shape[-1]
    H = hx_ref.shape[-1]

    x = x_ref[...]                         # [B, S]
    h = hx_ref[...]                        # [B, H]  (read BEFORE the aliased write)
    c = cx_ref[...]                        # [B, H]

    gates = (jnp.dot(x, w_xh_ref[:S, :], preferred_element_type=jnp.float32)
             + jnp.dot(h, w_xh_ref[S:, :], preferred_element_type=jnp.float32)
             + b_gates_ref[...])           # [B, 4H], bias pre-broadcast to [B,4H]

    i_g = jax.nn.sigmoid(gates[:, 0 * H:1 * H])
    f_g = jax.nn.sigmoid(gates[:, 1 * H:2 * H])
    g_g = jnp.tanh(gates[:, 2 * H:3 * H])
    o_g = jax.nn.sigmoid(gates[:, 3 * H:4 * H])

    c_next = f_g * c + i_g * g_g
    h_next = o_g * jnp.tanh(c_next)

    heads = jnp.dot(h_next, w_heads_ref[...],
                    preferred_element_type=jnp.float32) + b_heads_ref[...]

    heads_ref[...] = heads                 # [B, 2A] single fused head store
    hx_out_ref[...] = h_next               # aliased with hx input buffer
    cx_out_ref[...] = c_next               # aliased with cx input buffer


def _actor_rollout_kernel(x_ref, hx0_ref, cx0_ref,
                          w_xh_ref, b_gates_ref, w_heads_ref, b_heads_ref,
                          heads_ref, hx_out_ref, cx_out_ref):
    """Whole T-step recurrence inside ONE kernel invocation (no grid).

    Everything is resident in VMEM: states [T,B,S] in, heads [T,B,2A] out,
    fused weights, and the h/c carry lives in the fori_loop carry values.
    Single HBM DMA in for states, single HBM writeback for heads / h / c.
    """
    T = x_ref.shape[0]
    S = x_ref.shape[-1]
    H = hx0_ref.shape[-1]

    # Hoisted once (not per step): weight row-slices and pre-broadcast biases.
    w_x = w_xh_ref[:S, :]                  # [S, 4H]
    w_h = w_xh_ref[S:, :]                  # [H, 4H]
    b_g = b_gates_ref[...]                 # [B, 4H]
    w_hd = w_heads_ref[...]                # [H, 2A]
    b_hd = b_heads_ref[...]                # [B, 2A]

    def body(t, carry):
        h, c = carry
        x = x_ref[t]                       # [B, S] resident load, no DMA

        gates = (jnp.dot(x, w_x, preferred_element_type=jnp.float32)
                 + jnp.dot(h, w_h, preferred_element_type=jnp.float32)
                 + b_g)

        i_g = jax.nn.sigmoid(gates[:, 0 * H:1 * H])
        f_g = jax.nn.sigmoid(gates[:, 1 * H:2 * H])
        g_g = jnp.tanh(gates[:, 2 * H:3 * H])
        o_g = jax.nn.sigmoid(gates[:, 3 * H:4 * H])

        c_n = f_g * c + i_g * g_g
        h_n = o_g * jnp.tanh(c_n)

        heads_ref[t] = (jnp.dot(h_n, w_hd, preferred_element_type=jnp.float32)
                        + b_hd)            # write into resident [T,B,2A] block
        return h_n, c_n

    # unroll=True: static T, lets the LLO scheduler overlap step t's head
    # matmul (MXU) with step t+1's gate activations (EUP/VPU).
    h_f, c_f = jax.lax.fori_loop(0, T, body,
                                 (hx0_ref[...], cx0_ref[...]), unroll=True)
    hx_out_ref[...] = h_f
    cx_out_ref[...] = c_f


# ---------------------------------------------------------------------------
# Wrappers
# ---------------------------------------------------------------------------
_VMEM = pl.BlockSpec(memory_space=pltpu.MemorySpace.VMEM)


@jax.jit
def gaussian_policy_actor_forward(state, hx, cx, packed):
    """Single step, matching the PyTorch module forward signature.

    state : [B, state_dim] f32 ; hx, cx : [B, hidden] f32
    returns (mean, logstd, hx_next, cx_next)
    """
    B = state.shape[0]
    H = hx.shape[-1]
    A2 = packed["w_heads"].shape[-1]
    A = A2 // 2

    heads, hx_next, cx_next = pl.pallas_call(
        _actor_step_kernel,
        out_shape=(
            jax.ShapeDtypeStruct((B, A2), jnp.float32),   # [mean | logstd]
            jax.ShapeDtypeStruct((B, H), jnp.float32),    # hx_next
            jax.ShapeDtypeStruct((B, H), jnp.float32),    # cx_next
        ),
        in_specs=[_VMEM] * 7,
        out_specs=[_VMEM] * 3,
        # Recurrent state buffers reused in place: hx -> hx_next, cx -> cx_next.
        input_output_aliases={1: 1, 2: 2},
    )(state, hx, cx,
      packed["w_xh"], packed["b_gates"], packed["w_heads"], packed["b_heads"])

    return heads[:, :A], heads[:, A:], hx_next, cx_next


@jax.jit
def gaussian_policy_actor_rollout(states, hx, cx, packed):
    """Run T recurrent steps in a single (grid-less) pallas_call.

    states : [T, B, state_dim] f32 ; hx, cx : [B, hidden] f32
    returns (mean_seq [T,B,A], logstd_seq [T,B,A], hx_final, cx_final)
    """
    T, B, S = states.shape
    H = hx.shape[-1]
    A2 = packed["w_heads"].shape[-1]
    A = A2 // 2

    heads_seq, hx_final, cx_final = pl.pallas_call(
        _actor_rollout_kernel,
        out_shape=(
            jax.ShapeDtypeStruct((T, B, A2), jnp.float32),  # per-step heads
            jax.ShapeDtypeStruct((B, H), jnp.float32),      # hx_final
            jax.ShapeDtypeStruct((B, H), jnp.float32),      # cx_final
        ),
        in_specs=[_VMEM] * 7,      # fully resident: states, h0, c0, weights
        out_specs=[_VMEM] * 3,     # fully resident: heads, h/c finals
    )(states, hx, cx,
      packed["w_xh"], packed["b_gates"], packed["w_heads"], packed["b_heads"])

    return heads_seq[..., :A], heads_seq[..., A:], hx_final, cx_final


# ---------------------------------------------------------------------------
# Params
# ---------------------------------------------------------------------------
def init_params(key, state_dim, action_dim, hidden_size):
    """PyTorch-layout params with the default uniform(-k, k) init ranges."""
    ks = jax.random.split(key, 8)
    k_lstm = 1.0 / math.sqrt(hidden_size)   # LSTMCell: U(-1/sqrt(H), 1/sqrt(H))
    k_lin = 1.0 / math.sqrt(hidden_size)    # Linear(H, A): U(-1/sqrt(H), 1/sqrt(H))
    u = lambda k, shape, lim: jax.random.uniform(
        k, shape, dtype=jnp.float32, minval=-lim, maxval=lim)
    return {
        "w_ih": u(ks[0], (4 * hidden_size, state_dim), k_lstm),
        "w_hh": u(ks[1], (4 * hidden_size, hidden_size), k_lstm),
        "b_ih": u(ks[2], (4 * hidden_size,), k_lstm),
        "b_hh": u(ks[3], (4 * hidden_size,), k_lstm),
        "w_mean": u(ks[4], (action_dim, hidden_size), k_lin),
        "b_mean": u(ks[5], (action_dim,), k_lin),
        "w_logstd": u(ks[6], (action_dim, hidden_size), k_lin),
        "b_logstd": u(ks[7], (action_dim,), k_lin),
    }


def pack_params(params, batch_size):
    """One-time fusion into kernel layout (done at init, NOT per forward call).

    Biases are pre-broadcast to the batch dim so no broadcast_in_dim is
    re-emitted inside the unrolled time loop (JAX does not CSE broadcasts).
    """
    w_xh = jnp.concatenate([params["w_ih"].T, params["w_hh"].T], axis=0)   # [S+H,4H]
    b_gates = jnp.broadcast_to((params["b_ih"] + params["b_hh"])[None, :],
                               (batch_size, params["b_ih"].shape[0]))      # [B, 4H]
    w_heads = jnp.concatenate([params["w_mean"].T, params["w_logstd"].T],
                              axis=1)                                      # [H, 2A]
    b_heads = jnp.broadcast_to(
        jnp.concatenate([params["b_mean"], params["b_logstd"]])[None, :],
        (batch_size, 2 * params["b_mean"].shape[0]))                       # [B, 2A]
    return {"w_xh": jnp.asarray(w_xh), "b_gates": jnp.asarray(b_gates),
            "w_heads": jnp.asarray(w_heads), "b_heads": jnp.asarray(b_heads)}


# ---------------------------------------------------------------------------
# Pure-JAX references
# ---------------------------------------------------------------------------
def _reference_forward(state, hx, cx, params):
    gates = (state @ params["w_ih"].T + params["b_ih"]
             + hx @ params["w_hh"].T + params["b_hh"])
    H = hx.shape[-1]
    i = jax.nn.sigmoid(gates[:, 0:H])
    f = jax.nn.sigmoid(gates[:, H:2 * H])
    g = jnp.tanh(gates[:, 2 * H:3 * H])
    o = jax.nn.sigmoid(gates[:, 3 * H:4 * H])
    c_next = f * cx + i * g
    h_next = o * jnp.tanh(c_next)
    mean = h_next @ params["w_mean"].T + params["b_mean"]
    logstd = h_next @ params["w_logstd"].T + params["b_logstd"]
    return mean, logstd, h_next, c_next


def _reference_rollout(states, hx, cx, params):
    def step(carry, x):
        h, c = carry
        m, ls, h, c = _reference_forward(x, h, c, params)
        return (h, c), (m, ls)
    (h, c), (ms, lss) = jax.lax.scan(step, (hx, cx), states)
    return ms, lss, h, c


# ---------------------------------------------------------------------------
if __name__ == "__main__":
    B, STATE_DIM, ACTION_DIM, HIDDEN, T = 8, 16, 8, 32, 12

    key = jax.random.PRNGKey(0)
    k_params, k_state, k_h, k_c, k_seq = jax.random.split(key, 5)

    params = init_params(k_params, STATE_DIM, ACTION_DIM, HIDDEN)
    packed = pack_params(params, B)        # hoisted: layout fusion happens once

    state = jax.random.normal(k_state, (B, STATE_DIM), dtype=jnp.float32)
    hx = jax.random.normal(k_h, (B, HIDDEN), dtype=jnp.float32)
    cx = jax.random.normal(k_c, (B, HIDDEN), dtype=jnp.float32)
    states_seq = jax.random.normal(k_seq, (T, B, STATE_DIM), dtype=jnp.float32)

    # --- single step (matches the PyTorch module's forward) ---
    out = gaussian_policy_actor_forward(state, hx, cx, packed)
    jax.block_until_ready(out)
    ref = _reference_forward(state, hx, cx, params)
    for got, want in zip(out, ref):
        assert got.shape == want.shape
        assert jnp.max(jnp.abs(got - want)) < 2e-5

    # --- full T-step recurrence inside one grid-less pallas_call ---
    roll = gaussian_policy_actor_rollout(states_seq, hx, cx, packed)
    jax.block_until_ready(roll)
    roll_ref = _reference_rollout(states_seq, hx, cx, params)
    for got, want in zip(roll, roll_ref):
        assert got.shape == want.shape
        assert jnp.max(jnp.abs(got - want)) < 1e-4

    print("KERNEL_OK")
</pallas_src>

<mosaic_0001>
module attributes {stable_mosaic.version = 11 : i64} {
  func.func @_actor_step_kernel(%arg0: memref<8x16xf32, #tpu.memory_space<vmem>>, %arg1: memref<8x32xf32, #tpu.memory_space<vmem>>, %arg2: memref<8x32xf32, #tpu.memory_space<vmem>>, %arg3: memref<48x128xf32, #tpu.memory_space<vmem>>, %arg4: memref<8x128xf32, #tpu.memory_space<vmem>>, %arg5: memref<32x16xf32, #tpu.memory_space<vmem>>, %arg6: memref<8x16xf32, #tpu.memory_space<vmem>>, %arg7: memref<8x16xf32, #tpu.memory_space<vmem>>, %arg8: memref<8x32xf32, #tpu.memory_space<vmem>>, %arg9: memref<8x32xf32, #tpu.memory_space<vmem>>) attributes {dimension_semantics = [], scalar_prefetch = 0 : i64, scratch_operands = 0 : i64, tpu.core_type = #tpu.core_type<tc>} {
    %c0 = arith.constant 0 : index
    %c0_0 = arith.constant 0 : index
    %0 = vector.load %arg0[%c0, %c0_0] : memref<8x16xf32, #tpu.memory_space<vmem>>, vector<8x16xf32>
    %c0_1 = arith.constant 0 : index
    %c0_2 = arith.constant 0 : index
    %1 = vector.load %arg1[%c0_1, %c0_2] : memref<8x32xf32, #tpu.memory_space<vmem>>, vector<8x32xf32>
    %c0_3 = arith.constant 0 : index
    %c0_4 = arith.constant 0 : index
    %2 = vector.load %arg2[%c0_3, %c0_4] : memref<8x32xf32, #tpu.memory_space<vmem>>, vector<8x32xf32>
    %c0_5 = arith.constant 0 : index
    %c0_6 = arith.constant 0 : index
    %3 = vector.load %arg3[%c0_5, %c0_6] : memref<48x128xf32, #tpu.memory_space<vmem>>, vector<16x128xf32>
    %cst = arith.constant dense<0.000000e+00> : vector<8x128xf32>
    %4 = tpu.matmul %0, %3, %cst {dimension_numbers = #tpu.dot_dimension_numbers<[1], [0], [0], [1], [0, 0, 1, 1], [], []>} : vector<8x16xf32>, vector<16x128xf32>, vector<8x128xf32> -> vector<8x128xf32>
    %c16 = arith.constant 16 : index
    %c0_7 = arith.constant 0 : index
    %5 = vector.load %arg3[%c16, %c0_7] : memref<48x128xf32, #tpu.memory_space<vmem>>, vector<32x128xf32>
    %cst_8 = arith.constant dense<0.000000e+00> : vector<8x128xf32>
    %6 = tpu.matmul %1, %5, %cst_8 {dimension_numbers = #tpu.dot_dimension_numbers<[1], [0], [0], [1], [0, 0, 1, 1], [], []>} : vector<8x32xf32>, vector<32x128xf32>, vector<8x128xf32> -> vector<8x128xf32>
    %7 = arith.addf %4, %6 : vector<8x128xf32>
    %c0_9 = arith.constant 0 : index
    %c0_10 = arith.constant 0 : index
    %8 = vector.load %arg4[%c0_9, %c0_10] : memref<8x128xf32, #tpu.memory_space<vmem>>, vector<8x128xf32>
    %9 = arith.addf %7, %8 : vector<8x128xf32>
    %10 = vector.extract_strided_slice %9 {offsets = [0, 0], sizes = [8, 32], strides = [1, 1]} : vector<8x128xf32> to vector<8x32xf32>
    %11 = arith.negf %10 : vector<8x32xf32>
    %12 = math.exp %11 : vector<8x32xf32>
    %cst_11 = arith.constant 1.000000e+00 : f32
    %13 = vector.broadcast %cst_11 : f32 to vector<8x32xf32>
    %14 = arith.addf %13, %12 : vector<8x32xf32>
    %15 = arith.divf %13, %14 : vector<8x32xf32>
    %16 = vector.extract_strided_slice %9 {offsets = [0, 32], sizes = [8, 32], strides = [1, 1]} : vector<8x128xf32> to vector<8x32xf32>
    %17 = arith.negf %16 : vector<8x32xf32>
    %18 = math.exp %17 : vector<8x32xf32>
    %cst_12 = arith.constant 1.000000e+00 : f32
    %19 = vector.broadcast %cst_12 : f32 to vector<8x32xf32>
    %20 = arith.addf %19, %18 : vector<8x32xf32>
    %21 = arith.divf %19, %20 : vector<8x32xf32>
    %22 = vector.extract_strided_slice %9 {offsets = [0, 64], sizes = [8, 32], strides = [1, 1]} : vector<8x128xf32> to vector<8x32xf32>
    %23 = math.tanh %22 : vector<8x32xf32>
    %24 = vector.extract_strided_slice %9 {offsets = [0, 96], sizes = [8, 32], strides = [1, 1]} : vector<8x128xf32> to vector<8x32xf32>
    %25 = arith.negf %24 : vector<8x32xf32>
    %26 = math.exp %25 : vector<8x32xf32>
    %cst_13 = arith.constant 1.000000e+00 : f32
    %27 = vector.broadcast %cst_13 : f32 to vector<8x32xf32>
    %28 = arith.addf %27, %26 : vector<8x32xf32>
    %29 = arith.divf %27, %28 : vector<8x32xf32>
    %30 = arith.mulf %21, %2 : vector<8x32xf32>
    %31 = arith.mulf %15, %23 : vector<8x32xf32>
    %32 = arith.addf %30, %31 : vector<8x32xf32>
    %33 = math.tanh %32 : vector<8x32xf32>
    %34 = arith.mulf %29, %33 : vector<8x32xf32>
    %c0_14 = arith.constant 0 : index
    %c0_15 = arith.constant 0 : index
    %35 = vector.load %arg5[%c0_14, %c0_15] : memref<32x16xf32, #tpu.memory_space<vmem>>, vector<32x16xf32>
    %cst_16 = arith.constant dense<0.000000e+00> : vector<8x16xf32>
    %36 = tpu.matmul %34, %35, %cst_16 {dimension_numbers = #tpu.dot_dimension_numbers<[1], [0], [0], [1], [0, 0, 1, 1], [], []>} : vector<8x32xf32>, vector<32x16xf32>, vector<8x16xf32> -> vector<8x16xf32>
    %c0_17 = arith.constant 0 : index
    %c0_18 = arith.constant 0 : index
    %37 = vector.load %arg6[%c0_17, %c0_18] : memref<8x16xf32, #tpu.memory_space<vmem>>, vector<8x16xf32>
    %38 = arith.addf %36, %37 : vector<8x16xf32>
    %c0_19 = arith.constant 0 : index
    %c0_20 = arith.constant 0 : index
    %39 = vector.load %arg7[%c0_19, %c0_20] : memref<8x16xf32, #tpu.memory_space<vmem>>, vector<8x16xf32>
    tpu.vector_store %arg7[%c0_19, %c0_20], %38 {strides = array<i32>} : memref<8x16xf32, #tpu.memory_space<vmem>>, vector<8x16xf32>,
    %c0_21 = arith.constant 0 : index
    %c0_22 = arith.constant 0 : index
    %40 = vector.load %arg8[%c0_21, %c0_22] : memref<8x32xf32, #tpu.memory_space<vmem>>, vector<8x32xf32>
    tpu.vector_store %arg8[%c0_21, %c0_22], %34 {strides = array<i32>} : memref<8x32xf32, #tpu.memory_space<vmem>>, vector<8x32xf32>,
    %c0_23 = arith.constant 0 : index
    %c0_24 = arith.constant 0 : index
    %41 = vector.load %arg9[%c0_23, %c0_24] : memref<8x32xf32, #tpu.memory_space<vmem>>, vector<8x32xf32>
    tpu.vector_store %arg9[%c0_23, %c0_24], %32 {strides = array<i32>} : memref<8x32xf32, #tpu.memory_space<vmem>>, vector<8x32xf32>,
    return
  }
}

</mosaic_0001>

<llo_original>
// kernel: gaussian_policy_actor_forward.1
$region0: #{gaussian_policy_actor_forward.1}
  #allocation0 [shape = 'u32[]', space=smem, size = 0x4, offset = 0x4, fixed_abs, tag = 'smem constant byte address 0x4 - core index']
  #allocation1 [shape = 'u32[144,128]{1,0:T(1,128)}', space=vmem, size = 0x12000, scoped, tag = 'internal scratch']
  %s0 = inlined_call_operand.vmem [shape: f32[8,16], index: 0, kind: input, shape index: {}]
  %s1 = inlined_call_operand.vmem [shape: f32[8,32], index: 1, kind: input, shape index: {}, may-alias: {1,8}]
  %s2 = inlined_call_operand.vmem [shape: f32[8,32], index: 2, kind: input, shape index: {}, may-alias: {2,9}]
  %s3 = inlined_call_operand.vmem [shape: f32[48,128], index: 3, kind: input, shape index: {}]
  %s4 = inlined_call_operand.hbm [shape: f32[8,128], index: 4, kind: input, shape index: {}]
  %s5 = inlined_call_operand.vmem [shape: f32[32,16], index: 5, kind: input, shape index: {}]
  %s6 = inlined_call_operand.hbm [shape: f32[8,16], index: 6, kind: input, shape index: {}]
  %s7 = inlined_call_operand.vmem [shape: f32[8,16], index: 7, kind: output, shape index: {0}]
  %s8 = inlined_call_operand.vmem [shape: f32[8,32], index: 8, kind: output, shape index: {1}, may-alias: {1,8}]
  %s9 = inlined_call_operand.vmem [shape: f32[8,32], index: 9, kind: output, shape index: {2}, may-alias: {2,9}]
  %10 = xla_tuple %s7, %s8, %s9
  %s11 = sld [smem:[#allocation0]]
  $region62: #{gaussian_policy_actor_forward.1} parent=0
    _
  %s13 = ssub.s32 1, %s11
  %s14 = scalar_select 0, %s13, %s11
  $region1: #{gaussian_policy_actor_forward.1} parent=0
    #allocation2 [shape = 'u8[4096]{0}', space=vmem, size = 0x1000, scoped, tag = 'input window, operand 4, single buffered']
    #allocation3 [shape = 's32[1]{0}', space=sflag, size = 0x4, scoped, tag = 'scoped memory for gaussian_policy_actor_forward.1']
    #allocation4 [shape = 'u8[4096]{0}', space=vmem, size = 0x1000, scoped, tag = 'input window, operand 6, single buffered']
    #allocation5 [shape = 's32[1]{0}', space=sflag, size = 0x4, scoped, tag = 'scoped memory for gaussian_policy_actor_forward.1']
    %15 = vsyncpa [#allocation3], 0
    %16 = vsyncpa [#allocation5], 0
    // Predicated region
    $region2: #{gaussian_policy_actor_forward.1} parent=1 // pred_check
      _
    $region3: #{gaussian_policy_actor_forward.1} parent=1 // pred_check_branch
      %18 = sbr.rel (0) target = $region5
    $region4: #{gaussian_policy_actor_forward.1} parent=1 // pred_region
      _
    $region5: #{gaussian_policy_actor_forward.1} parent=1 // pred_fallthru
      _
    // Predicated region
    $region6: #{gaussian_policy_actor_forward.1} parent=1 // pred_check
      _
    $region7: #{gaussian_policy_actor_forward.1} parent=1 // pred_check_branch
      %20 = sbr.rel (0) target = $region9
    $region8: #{gaussian_policy_actor_forward.1} parent=1 // pred_region
      _
    $region9: #{gaussian_policy_actor_forward.1} parent=1 // pred_fallthru
      _
    // Predicated region
    $region10: #{gaussian_policy_actor_forward.1} parent=1 // pred_check
      _
    $region11: #{gaussian_policy_actor_forward.1} parent=1 // pred_check_branch
      %22 = sbr.rel (0) target = $region13
    $region12: #{gaussian_policy_actor_forward.1} parent=1 // pred_region
      _
    $region13: #{gaussian_policy_actor_forward.1} parent=1 // pred_fallthru
      _
    // Predicated region
    $region14: #{gaussian_policy_actor_forward.1} parent=1 // pred_check
      _
    $region15: #{gaussian_policy_actor_forward.1} parent=1 // pred_check_branch
      %24 = sbr.rel (0) target = $region17
    $region16: #{gaussian_policy_actor_forward.1} parent=1 // pred_region
      _
    $region17: #{gaussian_policy_actor_forward.1} parent=1 // pred_fallthru
      _
    // Predicated region
    $region18: #{gaussian_policy_actor_forward.1} parent=1 // pred_check
      _
    $region19: #{gaussian_policy_actor_forward.1} parent=1 // pred_check_branch
      %26 = sbr.rel (0) target = $region21
    $region20: #{gaussian_policy_actor_forward.1} parent=1 // pred_region
      %s28 = ssub.s32 128, 128
      %29 = vsyncadd [#allocation3], %s28
      %s31 = sshll.u32 [#allocation2], 4
      %s32 = int_to_ptr.vmem [resolvable:$true] %s31
      %34 = dma.hbm_to_vmem [thread:$0]  %s4, 128, %s32, [#allocation3]
    $region21: #{gaussian_policy_actor_forward.1} parent=1 // pred_fallthru
      _
    // Predicated region
    $region22: #{gaussian_policy_actor_forward.1} parent=1 // pred_check
      _
    $region23: #{gaussian_policy_actor_forward.1} parent=1 // pred_check_branch
      %36 = sbr.rel (0) target = $region25
    $region24: #{gaussian_policy_actor_forward.1} parent=1 // pred_region
      _
    $region25: #{gaussian_policy_actor_forward.1} parent=1 // pred_fallthru
      _
    // Predicated region
    $region26: #{gaussian_policy_actor_forward.1} parent=1 // pred_check
      _
    $region27: #{gaussian_policy_actor_forward.1} parent=1 // pred_check_branch
      %38 = sbr.rel (0) target = $region29
    $region28: #{gaussian_policy_actor_forward.1} parent=1 // pred_region
      %s40 = ssub.s32 128, 128
      %41 = vsyncadd [#allocation5], %s40
      %s43 = sshll.u32 [#allocation4], 4
      %s44 = int_to_ptr.vmem [resolvable:$true] %s43
      %46 = dma.hbm_to_vmem [thread:$0]  %s6, 128, %s44, [#allocation5]
    $region29: #{gaussian_policy_actor_forward.1} parent=1 // pred_fallthru
      _
    // Predicated region
    $region30: #{gaussian_policy_actor_forward.1} parent=1 // pred_check
      _
    $region31: #{gaussian_policy_actor_forward.1} parent=1 // pred_check_branch
      %48 = sbr.rel (0) target = $region33
    $region32: #{gaussian_policy_actor_forward.1} parent=1 // pred_region
      %49 = dma.done [#allocation3], 128
    $region33: #{gaussian_policy_actor_forward.1} parent=1 // pred_fallthru
      _
    // Predicated region
    $region34: #{gaussian_policy_actor_forward.1} parent=1 // pred_check
      _
    $region35: #{gaussian_policy_actor_forward.1} parent=1 // pred_check_branch
      %51 = sbr.rel (0) target = $region37
    $region36: #{gaussian_policy_actor_forward.1} parent=1 // pred_region
      %52 = dma.done [#allocation5], 128
    $region37: #{gaussian_policy_actor_forward.1} parent=1 // pred_fallthru
      _
    %v53 = vld [vmem:[%s0] sm:$0xff]
    %v54 = vld [vmem:[%s1] sm:$0xff]
    %v55 = vld [vmem:[%s2] sm:$0xff]
    %v56 = vld [vmem:[%s3] sm:$0xff]
    %v57 = vld [vmem:[%s3 + $0x8] sm:$0xff]
    %v58 = vld [vmem:[%s3 + $0x10] sm:$0xff]
    %v59 = vld [vmem:[%s3 + $0x18] sm:$0xff]
    %v60 = vld [vmem:[%s3 + $0x20] sm:$0xff]
    %v61 = vld [vmem:[%s3 + $0x28] sm:$0xff]
    %vm62 = vcmask 261120
    %v64 = vsel %vm62, %v54, 0
    %66 = vmatprep.subr.mxu0 0.0
    %67 = vmatpush1.msra.mxu0 0.0
    %68 = vmatprep.subr.mxu0 0.0
    %69 = vmatpush1.msra.mxu0 0.0
    %70 = vmatprep.subr.mxu0 0.0
    %71 = vmatpush1.msra.mxu0 0.0
    %72 = vmatprep.subr.mxu0 0.0
    %73 = vmatpush1.msra.mxu0 0.0
    %74 = vmatprep.subr.mxu0 0.0
    %75 = vmatpush1.msra.mxu0 0.0
    %76 = vmatprep.subr.mxu0 0.0
    %77 = vmatpush1.msra.mxu0 0.0
    %78 = vmatprep.subr.mxu0 0.0
    %79 = vmatpush1.msra.mxu0 0.0
    %80 = vmatprep.subr.mxu0 0.0
    %81 = vmatpush1.msra.mxu0 0.0
    %82 = vmatprep.subr.mxu0 0.0
    %83 = vmatpush1.msra.mxu0 0.0
    %84 = vmatprep.subr.mxu0 0.0
    %85 = vmatpush1.msra.mxu0 0.0
    %86 = vmatprep.subr.mxu0 0.0
    %87 = vmatpush1.msra.mxu0 0.0
    %88 = vmatprep.subr.mxu0 0.0
    %89 = vmatpush1.msra.mxu0 0.0
    %90 = vmatprep.subr.mxu0 0.0
    %91 = vmatpush1.msra.mxu0 %v61
    %92 = vmatprep.subr.mxu0 0.0
    %93 = vmatpush1.msra.mxu0 %v60
    %94 = vmatprep.subr.mxu0 0.0
    %95 = vmatpush1.msra.mxu0 %v59
    %96 = vmatprep.subr.mxu0 0.0
    %97 = vmatpush1.msra.mxu0 %v58
    %98 = vmatprep.subr.mxu0 0.0
    %99 = vmatpush2.msra.mxu0 0.0
    %100 = vmatprep.subr.mxu0 0.0
    %101 = vmatpush2.msra.mxu0 0.0
    %102 = vmatprep.subr.mxu0 0.0
    %103 = vmatpush2.msra.mxu0 0.0
    %104 = vmatprep.subr.mxu0 0.0
    %105 = vmatpush2.msra.mxu0 0.0
    %106 = vmatprep.subr.mxu0 0.0
    %107 = vmatpush2.msra.mxu0 0.0
    %108 = vmatprep.subr.mxu0 0.0
    %109 = vmatpush2.msra.mxu0 0.0
    %110 = vmatprep.subr.mxu0 0.0
    %111 = vmatpush2.msra.mxu0 0.0
    %112 = vmatprep.subr.mxu0 0.0
    %113 = vmatpush2.msra.mxu0 0.0
    %114 = vmatprep.subr.mxu0 0.0
    %115 = vmatpush2.msra.mxu0 0.0
    %116 = vmatprep.subr.mxu0 0.0
    %117 = vmatpush2.msra.mxu0 0.0
    %118 = vmatprep.subr.mxu0 0.0
    %119 = vmatpush2.msra.mxu0 0.0
    %120 = vmatprep.subr.mxu0 0.0
    %121 = vmatpush2.msra.mxu0 0.0
    %122 = vmatprep.subr.mxu0 0.0
    %123 = vmatpush2.msra.mxu0 0.0
    %124 = vmatprep.subr.mxu0 0.0
    %125 = vmatpush2.msra.mxu0 0.0
    %126 = vmatprep.subr.mxu0 0.0
    %127 = vmatpush2.msra.mxu0 0.0
    %128 = vmatprep.subr.mxu0 0.0
    %129 = vmatpush2.msra.mxu0 0.0
    %130 = vmatprep.mubr.f32.mxu0 0.0
    %131 = vmatmul.mubr.f32.gmra.mxu0 %v64
    %v132 = vpop.f32.mrf.mxu0
    %v133 = vadd.f32 0.0, %v132
    %v134 = vpop.f32.mrf.mxu0
    %135 = vdwg.mxu0
    %vm136 = vcmask 130048
    %v138 = vsel %vm136, %v53, 0
    %140 = vmatprep.subr.mxu0 0.0
    %141 = vmatpush1.msra.mxu0 0.0
    %142 = vmatprep.subr.mxu0 0.0
    %143 = vmatpush1.msra.mxu0 0.0
    %144 = vmatprep.subr.mxu0 0.0
    %145 = vmatpush1.msra.mxu0 0.0
    %146 = vmatprep.subr.mxu0 0.0
    %147 = vmatpush1.msra.mxu0 0.0
    %148 = vmatprep.subr.mxu0 0.0
    %149 = vmatpush1.msra.mxu0 0.0
    %150 = vmatprep.subr.mxu0 0.0
    %151 = vmatpush1.msra.mxu0 0.0
    %152 = vmatprep.subr.mxu0 0.0
    %153 = vmatpush1.msra.mxu0 0.0
    %154 = vmatprep.subr.mxu0 0.0
    %155 = vmatpush1.msra.mxu0 0.0
    %156 = vmatprep.subr.mxu0 0.0
    %157 = vmatpush1.msra.mxu0 0.0
    %158 = vmatprep.subr.mxu0 0.0
    %159 = vmatpush1.msra.mxu0 0.0
    %160 = vmatprep.subr.mxu0 0.0
    %161 = vmatpush1.msra.mxu0 0.0
    %162 = vmatprep.subr.mxu0 0.0
    %163 = vmatpush1.msra.mxu0 0.0
    %164 = vmatprep.subr.mxu0 0.0
    %165 = vmatpush1.msra.mxu0 0.0
    %166 = vmatprep.subr.mxu0 0.0
    %167 = vmatpush1.msra.mxu0 0.0
    %168 = vmatprep.subr.mxu0 0.0
    %169 = vmatpush1.msra.mxu0 %v57
    %170 = vmatprep.subr.mxu0 0.0
    %171 = vmatpush1.msra.mxu0 %v56
    %172 = vmatprep.subr.mxu0 0.0
    %173 = vmatpush2.msra.mxu0 0.0
    %174 = vmatprep.subr.mxu0 0.0
    %175 = vmatpush2.msra.mxu0 0.0
    %176 = vmatprep.subr.mxu0 0.0
    %177 = vmatpush2.msra.mxu0 0.0
    %178 = vmatprep.subr.mxu0 0.0
    %179 = vmatpush2.msra.mxu0 0.0
    %180 = vmatprep.subr.mxu0 0.0
    %181 = vmatpush2.msra.mxu0 0.0
    %182 = vmatprep.subr.mxu0 0.0
    %183 = vmatpush2.msra.mxu0 0.0
    %184 = vmatprep.subr.mxu0 0.0
    %185 = vmatpush2.msra.mxu0 0.0
    %186 = vmatprep.subr.mxu0 0.0
    %187 = vmatpush2.msra.mxu0 0.0
    %188 = vmatprep.subr.mxu0 0.0
    %189 = vmatpush2.msra.mxu0 0.0
    %190 = vmatprep.subr.mxu0 0.0
    %191 = vmatpush2.msra.mxu0 0.0
    %192 = vmatprep.subr.mxu0 0.0
    %193 = vmatpush2.msra.mxu0 0.0
    %194 = vmatprep.subr.mxu0 0.0
    %195 = vmatpush2.msra.mxu0 0.0
    %196 = vmatprep.subr.mxu0 0.0
    %197 = vmatpush2.msra.mxu0 0.0
    %198 = vmatprep.subr.mxu0 0.0
    %199 = vmatpush2.msra.mxu0 0.0
    %200 = vmatprep.subr.mxu0 0.0
    %201 = vmatpush2.msra.mxu0 0.0
    %202 = vmatprep.subr.mxu0 0.0
    %203 = vmatpush2.msra.mxu0 0.0
    %204 = vmatprep.mubr.f32.mxu0 0.0
    %205 = vmatmul.mubr.f32.gmra.mxu0 %v138
    %v206 = vpop.f32.mrf.mxu0
    %v207 = vadd.f32 %v133, %v206
    %v208 = vpop.f32.mrf.mxu0
    %209 = vdwg.mxu0
    %v210 = vld [vmem:[#allocation2] sm:$0xff]
    %v211 = vadd.f32 %v207, %v210
    %v212 = vxor.u32 %v211, 2147483648
    %v213 = vmul.f32 %v212, 1.442695
    %v214 = vpow.pop %v213
    %v215 = vadd.f32 %v214, 1.0
    %v216 = vrcp.pop %v215
    %v217 = vmul.f32 1.0, %v216
    %v218 = vtanh.pop %v211
    %220 = vrot.lane.b32.xlu0 %v55, 32
    %v221 = vpop.permute.xlu0 %220
    %v223 = vmul.f32 %v217, %v221
    %225 = vrot.lane.b32.xlu0 %v218, 64
    %v226 = vpop.permute.xlu0 %225
    %v228 = vmul.f32 %v217, %v226
    %230 = vrot.lane.b32.xlu0 %v228, 32
    %v231 = vpop.permute.xlu0 %230
    %v233 = vadd.f32 %v223, %v231
    %v234 = vtanh.pop %v233
    %236 = vrot.lane.b32.xlu0 %v234, 64
    %v237 = vpop.permute.xlu0 %236
    %v239 = vmul.f32 %v217, %v237
    %v240 = vld [vmem:[%s5] sm:$0xff]
    %v241 = vld [vmem:[%s5 + $0x8] sm:$0xff]
    %v242 = vld [vmem:[%s5 + $0x10] sm:$0xff]
    %v243 = vld [vmem:[%s5 + $0x18] sm:$0xff]
    %v244 = vld [vmem:[#allocation4] sm:$0xff]
    %246 = vrot.lane.b32.xlu0 %v239, 32
    %v247 = vpop.permute.xlu0 %246
    %v248 = vsel %vm62, %v247, 0
    %250 = vmatprep.subr.mxu0 0.0
    %251 = vmatpush1.msra.mxu0 0.0
    %252 = vmatprep.subr.mxu0 0.0
    %253 = vmatpush1.msra.mxu0 0.0
    %254 = vmatprep.subr.mxu0 0.0
    %255 = vmatpush1.msra.mxu0 0.0
    %256 = vmatprep.subr.mxu0 0.0
    %257 = vmatpush1.msra.mxu0 0.0
    %258 = vmatprep.subr.mxu0 0.0
    %259 = vmatpush1.msra.mxu0 0.0
    %260 = vmatprep.subr.mxu0 0.0
    %261 = vmatpush1.msra.mxu0 0.0
    %262 = vmatprep.subr.mxu0 0.0
    %263 = vmatpush1.msra.mxu0 0.0
    %264 = vmatprep.subr.mxu0 0.0
    %265 = vmatpush1.msra.mxu0 0.0
    %266 = vmatprep.subr.mxu0 0.0
    %267 = vmatpush1.msra.mxu0 0.0
    %268 = vmatprep.subr.mxu0 0.0
    %269 = vmatpush1.msra.mxu0 0.0
    %270 = vmatprep.subr.mxu0 0.0
    %271 = vmatpush1.msra.mxu0 0.0
    %272 = vmatprep.subr.mxu0 0.0
    %273 = vmatpush1.msra.mxu0 0.0
    %274 = vmatprep.subr.mxu0 0.0
    %275 = vmatpush1.msra.mxu0 %v243
    %276 = vmatprep.subr.mxu0 0.0
    %277 = vmatpush1.msra.mxu0 %v242
    %278 = vmatprep.subr.mxu0 0.0
    %279 = vmatpush1.msra.mxu0 %v241
    %280 = vmatprep.subr.mxu0 0.0
    %281 = vmatpush1.msra.mxu0 %v240
    %282 = vmatprep.subr.mxu0 0.0
    %283 = vmatpush2.msra.mxu0 0.0
    %284 = vmatprep.subr.mxu0 0.0
    %285 = vmatpush2.msra.mxu0 0.0
    %286 = vmatprep.subr.mxu0 0.0
    %287 = vmatpush2.msra.mxu0 0.0
    %288 = vmatprep.subr.mxu0 0.0
    %289 = vmatpush2.msra.mxu0 0.0
    %290 = vmatprep.subr.mxu0 0.0
    %291 = vmatpush2.msra.mxu0 0.0
    %292 = vmatprep.subr.mxu0 0.0
    %293 = vmatpush2.msra.mxu0 0.0
    %294 = vmatprep.subr.mxu0 0.0
    %295 = vmatpush2.msra.mxu0 0.0
    %296 = vmatprep.subr.mxu0 0.0
    %297 = vmatpush2.msra.mxu0 0.0
    %298 = vmatprep.subr.mxu0 0.0
    %299 = vmatpush2.msra.mxu0 0.0
    %300 = vmatprep.subr.mxu0 0.0
    %301 = vmatpush2.msra.mxu0 0.0
    %302 = vmatprep.subr.mxu0 0.0
    %303 = vmatpush2.msra.mxu0 0.0
    %304 = vmatprep.subr.mxu0 0.0
    %305 = vmatpush2.msra.mxu0 0.0
    %306 = vmatprep.subr.mxu0 0.0
    %307 = vmatpush2.msra.mxu0 0.0
    %308 = vmatprep.subr.mxu0 0.0
    %309 = vmatpush2.msra.mxu0 0.0
    %310 = vmatprep.subr.mxu0 0.0
    %311 = vmatpush2.msra.mxu0 0.0
    %312 = vmatprep.subr.mxu0 0.0
    %313 = vmatpush2.msra.mxu0 0.0
    %314 = vmatprep.mubr.f32.mxu0 0.0
    %315 = vmatmul.mubr.f32.gmra.mxu0 %v248
    %v316 = vpop.f32.mrf.mxu0
    %v317 = vadd.f32 %v244, %v316
    %v318 = vpop.f32.mrf.mxu0
    %319 = vdwg.mxu0
    %320 = vst.msk [vmem:[%s7] sm:$0xff] %vm136, %v317
    %322 = vst.msk [vmem:[%s8] sm:$0xff] %vm62, %v247
    %324 = vrot.lane.b32.xlu0 %v233, 96
    %v325 = vpop.permute.xlu0 %324
    %327 = vst.msk [vmem:[%s9] sm:$0xff] %vm62, %v325
    // Predicated region
    $region38: #{gaussian_policy_actor_forward.1} parent=1 // pred_check
      _
    $region39: #{gaussian_policy_actor_forward.1} parent=1 // pred_check_branch
      %329 = sbr.rel (0) target = $region41
    $region40: #{gaussian_policy_actor_forward.1} parent=1 // pred_region
      _
    $region41: #{gaussian_policy_actor_forward.1} parent=1 // pred_fallthru
      _
    // Predicated region
    $region42: #{gaussian_policy_actor_forward.1} parent=1 // pred_check
      _
    $region43: #{gaussian_policy_actor_forward.1} parent=1 // pred_check_branch
      %331 = sbr.rel (0) target = $region45
    $region44: #{gaussian_policy_actor_forward.1} parent=1 // pred_region
      _
    $region45: #{gaussian_policy_actor_forward.1} parent=1 // pred_fallthru
      _
    // Predicated region
    $region46: #{gaussian_policy_actor_forward.1} parent=1 // pred_check
      _
    $region47: #{gaussian_policy_actor_forward.1} parent=1 // pred_check_branch
      %333 = sbr.rel (0) target = $region49
    $region48: #{gaussian_policy_actor_forward.1} parent=1 // pred_region
      _
    $region49: #{gaussian_policy_actor_forward.1} parent=1 // pred_fallthru
      _
    // Predicated region
    $region50: #{gaussian_policy_actor_forward.1} parent=1 // pred_check
      _
    $region51: #{gaussian_policy_actor_forward.1} parent=1 // pred_check_branch
      %335 = sbr.rel (0) target = $region53
    $region52: #{gaussian_policy_actor_forward.1} parent=1 // pred_region
      _
    $region53: #{gaussian_policy_actor_forward.1} parent=1 // pred_fallthru
      _
    // Predicated region
    $region54: #{gaussian_policy_actor_forward.1} parent=1 // pred_check
      _
    $region55: #{gaussian_policy_actor_forward.1} parent=1 // pred_check_branch
      %337 = sbr.rel (0) target = $region57
    $region56: #{gaussian_policy_actor_forward.1} parent=1 // pred_region
      _
    $region57: #{gaussian_policy_actor_forward.1} parent=1 // pred_fallthru
      _
    // Predicated region
    $region58: #{gaussian_policy_actor_forward.1} parent=1 // pred_check
      _
    $region59: #{gaussian_policy_actor_forward.1} parent=1 // pred_check_branch
      %339 = sbr.rel (0) target = $region61
    $region60: #{gaussian_policy_actor_forward.1} parent=1 // pred_region
      _
    $region61: #{gaussian_policy_actor_forward.1} parent=1 // pred_fallthru
      _
    %340 = vsyncpa [#allocation3], 1
    %341 = vsyncpa [#allocation5], 1

</llo_original>
